<compile_context>
chip_gen: v7x
topology: tpu7x:2x2x1
jax: 0.10.0
libtpu: 0.0.40
codegen_flags: <defaults>
</compile_context>

<pallas_src>
import functools

import jax
import jax.numpy as jnp
from jax.experimental import pallas as pl
from jax.experimental.pallas import tpu as pltpu


def _contagion_loss_kernel(logit_ref, target_ref, mask_ref, out_ref,
                           num_acc, den_acc, *, total_m, block_m):
    k = pl.program_id(1)

    @pl.when(k == 0)
    def _init():
        num_acc[...] = jnp.zeros_like(num_acc)
        den_acc[...] = jnp.zeros_like(den_acc)

    x = logit_ref[...].astype(jnp.float32)   # [TB, TM]
    t = target_ref[...].astype(jnp.float32)  # [TB, TM]
    m = mask_ref[...].astype(jnp.float32)    # [TB, TM]

    # Numerically-stable BCE-with-logits (matches torch.nn.BCEWithLogitsLoss):
    #   loss = max(x, 0) - x*t + log(1 + exp(-|x|))
    # exp/log go to the EUP; everything else is VPU filler under a mem-bound pass.
    loss = jnp.maximum(x, 0.0) - x * t + jnp.log1p(jnp.exp(-jnp.abs(x)))
    masked = loss * m

    # Mask out the padded lanes of the last M block (undefined data there).
    if total_m % block_m != 0:
        col = jax.lax.broadcasted_iota(jnp.int32, x.shape, 1) + k * block_m
        valid = col < total_m
        masked = jnp.where(valid, masked, 0.0)
        m = jnp.where(valid, m, 0.0)

    num_acc[...] += jnp.sum(masked, axis=-1, keepdims=True)  # [TB, 1]  (XLU reduce)
    den_acc[...] += jnp.sum(m, axis=-1, keepdims=True)       # [TB, 1]

    @pl.when(k == pl.num_programs(1) - 1)
    def _finalize():
        # Exact divide, once per B-tile; rows with den==0 give NaN/Inf, same as
        # the PyTorch reference.
        out_ref[...] = num_acc[...] / den_acc[...]


def contagion_loss(encounter_variables, encounter_is_contagion, mask,
                   *, block_b=256, block_m=2048):
    """ContagionLoss forward (allow_multiple_exposures=True).

    encounter_variables: [B, M, C] (channel 0 is the contagion logit) or a
                         pre-sliced [B, M] logit;
    encounter_is_contagion: [B, M] or [B, M, 1];
    mask: [B, M] or [B, M, 1].
    Inputs may be any float dtype (bf16 ok).  Returns a scalar f32 loss.
    """
    if encounter_variables.ndim == 3:
        # TODO(synk): ideally the producer stores the contagion logit contiguously
        # ([B, M] or channel-major) so this strided channel-0 slice (an extra HBM
        # pass done by XLA) disappears; a 2-D logit is accepted directly for that.
        logit = encounter_variables[:, :, 0]
    else:
        logit = encounter_variables

    target = encounter_is_contagion
    if target.ndim == 3:
        target = target[:, :, 0]
    if mask.ndim == 3:
        mask = mask[:, :, 0]

    B, M = logit.shape
    assert target.shape == (B, M)
    assert mask.shape == (B, M)

    # Tile sizes: full extent for small dims, otherwise hardware-aligned tiles.
    tb = B if B <= block_b else block_b
    tm = M if M <= block_m else block_m
    if tb < B:
        assert tb % 8 == 0, "block_b must be a multiple of 8 when tiling B"
    if tm < M:
        assert tm % 128 == 0, "block_m must be a multiple of 128 when tiling M"

    nb = pl.cdiv(B, tb)
    nm = pl.cdiv(M, tm)

    kernel = functools.partial(_contagion_loss_kernel, total_m=M, block_m=tm)

    per_row = pl.pallas_call(
        kernel,
        out_shape=jax.ShapeDtypeStruct((B, 1), jnp.float32),
        grid_spec=pltpu.PrefetchScalarGridSpec(
            num_scalar_prefetch=0,
            grid=(nb, nm),
            in_specs=[
                pl.BlockSpec((tb, tm), lambda i, k: (i, k)),
                pl.BlockSpec((tb, tm), lambda i, k: (i, k)),
                pl.BlockSpec((tb, tm), lambda i, k: (i, k)),
            ],
            out_specs=pl.BlockSpec((tb, 1), lambda i, k: (i, 0)),
            scratch_shapes=[
                pltpu.VMEM((tb, 1), jnp.float32),   # num accumulator
                pltpu.VMEM((tb, 1), jnp.float32),   # den accumulator
            ],
        ),
        compiler_params=pltpu.CompilerParams(
            dimension_semantics=("parallel", "arbitrary"),
        ),
    )(logit, target, mask)

    # Tiny [B] -> scalar reduction in plain JAX (negligible vs. the B*M streams).
    return jnp.mean(per_row[:, 0])


def _reference(encounter_variables, encounter_is_contagion, mask):
    x = encounter_variables[:, :, 0].astype(jnp.float32)
    t = encounter_is_contagion
    if t.ndim == 3:
        t = t[:, :, 0]
    t = t.astype(jnp.float32)
    m = mask
    if m.ndim == 3:
        m = m[:, :, 0]
    m = m.astype(jnp.float32)
    loss = jnp.maximum(x, 0.0) - x * t + jnp.log1p(jnp.exp(-jnp.abs(x)))
    return jnp.mean(jnp.sum(loss * m, axis=-1) / jnp.sum(m, axis=-1))


if __name__ == "__main__":
    key = jax.random.PRNGKey(0)
    k1, k2, k3 = jax.random.split(key, 3)

    # Small shapes; M chosen non-multiple of the M tile to exercise edge masking,
    # B a multiple of the B tile to exercise multiple "parallel" B tiles.
    B, M, C = 32, 300, 4
    encounter_variables = jax.random.normal(k1, (B, M, C), dtype=jnp.float32)
    # Binary target / mask stored in bf16 (exact for {0,1}) -> half HBM traffic.
    encounter_is_contagion = (
        jax.random.uniform(k2, (B, M, 1)) < 0.3
    ).astype(jnp.bfloat16)
    mask = (jax.random.uniform(k3, (B, M)) < 0.7).astype(jnp.bfloat16)
    mask = mask.at[:, 0].set(1.0)   # at least one valid entry per row (avoid /0)

    out = contagion_loss(
        encounter_variables, encounter_is_contagion, mask,
        block_b=16, block_m=128,    # small tiles to exercise the 2-D grid
    )
    out = jax.block_until_ready(out)

    ref = _reference(encounter_variables, encounter_is_contagion, mask)
    assert jnp.allclose(out, ref, rtol=1e-5, atol=1e-5), (out, ref)

    print("KERNEL_OK")
</pallas_src>

<mosaic_0001>
module attributes {stable_mosaic.version = 11 : i64} {
  func.func @_contagion_loss_kernel(%arg0: i32, %arg1: i32, %arg2: memref<16x128xf32, #tpu.memory_space<vmem>>, %arg3: memref<16x128xbf16, #tpu.memory_space<vmem>>, %arg4: memref<16x128xbf16, #tpu.memory_space<vmem>>, %arg5: memref<16x1xf32, #tpu.memory_space<vmem>>, %arg6: memref<16x1xf32, #tpu.memory_space<vmem>>, %arg7: memref<16x1xf32, #tpu.memory_space<vmem>>) attributes {dimension_semantics = [#tpu.dimension_semantics<parallel>, #tpu.dimension_semantics<arbitrary>], iteration_bounds = array<i64: 2, 3>, scalar_prefetch = 0 : i64, scratch_operands = 2 : i64, tpu.core_type = #tpu.core_type<tc>, window_params = [{transform_indices = @transform_0, window_bounds = array<i64: 16, 128>}, {transform_indices = @transform_1, window_bounds = array<i64: 16, 128>}, {transform_indices = @transform_2, window_bounds = array<i64: 16, 128>}, {transform_indices = @transform_3, window_bounds = array<i64: 16, 1>}]} {
    %c0_i32 = arith.constant 0 : i32
    %0 = arith.cmpi eq, %arg1, %c0_i32 : i32
    %1 = arith.extui %0 : i1 to i32
    %c0_i32_0 = arith.constant 0 : i32
    %2 = arith.cmpi ne, %1, %c0_i32_0 : i32
    scf.if %2 {
      %cst_20 = arith.constant 0.000000e+00 : f32
      %42 = vector.broadcast %cst_20 : f32 to vector<16x1xf32>
      %c0_21 = arith.constant 0 : index
      %c0_22 = arith.constant 0 : index
      %43 = vector.load %arg6[%c0_21, %c0_22] : memref<16x1xf32, #tpu.memory_space<vmem>>, vector<16x1xf32>
      tpu.vector_store %arg6[%c0_21, %c0_22], %42 {strides = array<i32>} : memref<16x1xf32, #tpu.memory_space<vmem>>, vector<16x1xf32>,
      %cst_23 = arith.constant 0.000000e+00 : f32
      %44 = vector.broadcast %cst_23 : f32 to vector<16x1xf32>
      %c0_24 = arith.constant 0 : index
      %c0_25 = arith.constant 0 : index
      %45 = vector.load %arg7[%c0_24, %c0_25] : memref<16x1xf32, #tpu.memory_space<vmem>>, vector<16x1xf32>
      tpu.vector_store %arg7[%c0_24, %c0_25], %44 {strides = array<i32>} : memref<16x1xf32, #tpu.memory_space<vmem>>, vector<16x1xf32>,
    } else {
    }
    %c0 = arith.constant 0 : index
    %c0_1 = arith.constant 0 : index
    %3 = vector.load %arg2[%c0, %c0_1] : memref<16x128xf32, #tpu.memory_space<vmem>>, vector<16x128xf32>
    %c0_2 = arith.constant 0 : index
    %c0_3 = arith.constant 0 : index
    %4 = vector.load %arg3[%c0_2, %c0_3] : memref<16x128xbf16, #tpu.memory_space<vmem>>, vector<16x128xbf16>
    %5 = arith.extf %4 : vector<16x128xbf16> to vector<16x128xf32>
    %c0_4 = arith.constant 0 : index
    %c0_5 = arith.constant 0 : index
    %6 = vector.load %arg4[%c0_4, %c0_5] : memref<16x128xbf16, #tpu.memory_space<vmem>>, vector<16x128xbf16>
    %7 = arith.extf %6 : vector<16x128xbf16> to vector<16x128xf32>
    %cst = arith.constant 0.000000e+00 : f32
    %8 = vector.broadcast %cst : f32 to vector<16x128xf32>
    %9 = arith.maximumf %3, %8 : vector<16x128xf32>
    %10 = arith.mulf %3, %5 : vector<16x128xf32>
    %11 = arith.subf %9, %10 : vector<16x128xf32>
    %12 = math.absf %3 : vector<16x128xf32>
    %cst_6 = arith.constant 0.000000e+00 : f32
    %13 = vector.broadcast %cst_6 : f32 to vector<16x128xf32>
    %14 = arith.subf %13, %12 : vector<16x128xf32>
    %15 = math.exp %14 : vector<16x128xf32>
    %16 = math.log1p %15 : vector<16x128xf32>
    %17 = arith.addf %11, %16 : vector<16x128xf32>
    %18 = arith.mulf %17, %7 : vector<16x128xf32>
    %19 = tpu.iota {dimensions = array<i32: 1>} : vector<16x128xi32>
    %c128_i32 = arith.constant 128 : i32
    %20 = arith.muli %arg1, %c128_i32 : i32
    %21 = vector.broadcast %20 : i32 to vector<16x128xi32>
    %22 = arith.addi %19, %21 : vector<16x128xi32>
    %c300_i32 = arith.constant 300 : i32
    %23 = vector.broadcast %c300_i32 : i32 to vector<16x128xi32>
    %24 = arith.cmpi slt, %22, %23 : vector<16x128xi32>
    %cst_7 = arith.constant 0.000000e+00 : f32
    %25 = vector.broadcast %cst_7 : f32 to vector<16x128xf32>
    %26 = arith.select %24, %18, %25 : vector<16x128xi1>, vector<16x128xf32>
    %cst_8 = arith.constant 0.000000e+00 : f32
    %27 = vector.broadcast %cst_8 : f32 to vector<16x128xf32>
    %28 = arith.select %24, %7, %27 : vector<16x128xi1>, vector<16x128xf32>
    %c0_9 = arith.constant 0 : index
    %c0_10 = arith.constant 0 : index
    %29 = vector.load %arg6[%c0_9, %c0_10] : memref<16x1xf32, #tpu.memory_space<vmem>>, vector<16x1xf32>
    %cst_11 = arith.constant dense<0.000000e+00> : vector<16xf32>
    %30 = vector.multi_reduction <add>, %26, %cst_11 [1] : vector<16x128xf32> to vector<16xf32>
    %31 = vector.shape_cast %30 : vector<16xf32> to vector<16x1xf32>
    %32 = arith.addf %29, %31 : vector<16x1xf32>
    %c0_12 = arith.constant 0 : index
    %c0_13 = arith.constant 0 : index
    %33 = vector.load %arg6[%c0_12, %c0_13] : memref<16x1xf32, #tpu.memory_space<vmem>>, vector<16x1xf32>
    tpu.vector_store %arg6[%c0_12, %c0_13], %32 {strides = array<i32>} : memref<16x1xf32, #tpu.memory_space<vmem>>, vector<16x1xf32>,
    %c0_14 = arith.constant 0 : index
    %c0_15 = arith.constant 0 : index
    %34 = vector.load %arg7[%c0_14, %c0_15] : memref<16x1xf32, #tpu.memory_space<vmem>>, vector<16x1xf32>
    %cst_16 = arith.constant dense<0.000000e+00> : vector<16xf32>
    %35 = vector.multi_reduction <add>, %28, %cst_16 [1] : vector<16x128xf32> to vector<16xf32>
    %36 = vector.shape_cast %35 : vector<16xf32> to vector<16x1xf32>
    %37 = arith.addf %34, %36 : vector<16x1xf32>
    %c0_17 = arith.constant 0 : index
    %c0_18 = arith.constant 0 : index
    %38 = vector.load %arg7[%c0_17, %c0_18] : memref<16x1xf32, #tpu.memory_space<vmem>>, vector<16x1xf32>
    tpu.vector_store %arg7[%c0_17, %c0_18], %37 {strides = array<i32>} : memref<16x1xf32, #tpu.memory_space<vmem>>, vector<16x1xf32>,
    %c2_i32 = arith.constant 2 : i32
    %39 = arith.cmpi eq, %arg1, %c2_i32 : i32
    %40 = arith.extui %39 : i1 to i32
    %c0_i32_19 = arith.constant 0 : i32
    %41 = arith.cmpi ne, %40, %c0_i32_19 : i32
    scf.if %41 {
      %c0_20 = arith.constant 0 : index
      %c0_21 = arith.constant 0 : index
      %42 = vector.load %arg6[%c0_20, %c0_21] : memref<16x1xf32, #tpu.memory_space<vmem>>, vector<16x1xf32>
      %c0_22 = arith.constant 0 : index
      %c0_23 = arith.constant 0 : index
      %43 = vector.load %arg7[%c0_22, %c0_23] : memref<16x1xf32, #tpu.memory_space<vmem>>, vector<16x1xf32>
      %44 = arith.divf %42, %43 : vector<16x1xf32>
      %c0_24 = arith.constant 0 : index
      %c0_25 = arith.constant 0 : index
      %45 = vector.load %arg5[%c0_24, %c0_25] : memref<16x1xf32, #tpu.memory_space<vmem>>, vector<16x1xf32>
      tpu.vector_store %arg5[%c0_24, %c0_25], %44 {strides = array<i32>} : memref<16x1xf32, #tpu.memory_space<vmem>>, vector<16x1xf32>,
    } else {
    }
    return
  }
  func.func @transform_0(%arg0: i32, %arg1: i32) -> (i32, i32) {
    %c0_i32 = arith.constant 0 : i32
    return %arg0, %arg1 : i32, i32
  }
  func.func @transform_1(%arg0: i32, %arg1: i32) -> (i32, i32) {
    %c0_i32 = arith.constant 0 : i32
    return %arg0, %arg1 : i32, i32
  }
  func.func @transform_2(%arg0: i32, %arg1: i32) -> (i32, i32) {
    %c0_i32 = arith.constant 0 : i32
    return %arg0, %arg1 : i32, i32
  }
  func.func @transform_3(%arg0: i32, %arg1: i32) -> (i32, i32) {
    %c0_i32 = arith.constant 0 : i32
    %c0_i32_0 = arith.constant 0 : i32
    return %arg0, %c0_i32 : i32, i32
  }
}

</mosaic_0001>

<llo_original>
// kernel: tpu_custom_call.1
$region0: #{tpu_custom_call.1}
  #allocation0 [shape = 'u32[]', space=smem, size = 0x4, offset = 0x4, fixed_abs, tag = 'smem constant byte address 0x4 - core index']
  #allocation1 [shape = 'u32[144,128]{1,0:T(1,128)}', space=vmem, size = 0x12000, scoped, tag = 'internal scratch']
  #allocation2 [shape = 'f32[16,1]{1,0:T(8,128)}', space=vmem, size = 0x2000, scoped, tag = 'scratch operand']
  #allocation3 [shape = 'f32[16,1]{1,0:T(8,128)}', space=vmem, size = 0x2000, scoped, tag = 'scratch operand']
  %s0 = inlined_call_operand.hbm [shape: f32[32,300], index: 0, kind: input, shape index: {}]
  %s1 = inlined_call_operand.hbm [shape: bf16[32,300], index: 1, kind: input, shape index: {}]
  %s2 = inlined_call_operand.hbm [shape: bf16[32,300], index: 2, kind: input, shape index: {}]
  %s3 = inlined_call_operand.vmem [shape: f32[32,1], index: 3, kind: output, shape index: {}]
  %s4 = sld [smem:[#allocation0]]
  $region65: #{tpu_custom_call.1} parent=0
    _
  %s6 = ssub.s32 1, %s4
  %s7 = scalar_select 0, %s6, %s4
  $region1: #{tpu_custom_call.1} parent=0
    #allocation4 [shape = 'u8[16384]{0}', space=vmem, size = 0x4000, scoped, tag = 'input window, operand 0']
    #allocation5 [shape = 's32[2]{0}', space=sflag, size = 0x8, scoped, tag = 'scoped memory for tpu_custom_call.1']
    #allocation6 [shape = 'u8[8192]{0}', space=vmem, size = 0x2000, scoped, tag = 'input window, operand 1']
    #allocation7 [shape = 's32[2]{0}', space=sflag, size = 0x8, scoped, tag = 'scoped memory for tpu_custom_call.1']
    #allocation8 [shape = 'u8[8192]{0}', space=vmem, size = 0x2000, scoped, tag = 'input window, operand 2']
    %8 = vsyncpa [#allocation5], 0
    %s9 = scalar_lea.sflag [#allocation5], 1
    %10 = vsyncpa %s9, 0
    %11 = vsyncpa [#allocation7], 0
    %s12 = scalar_lea.sflag [#allocation7], 1
    %13 = vsyncpa %s12, 0
    loop: start=0, step=1, limit=8
    $region2: #{tpu_custom_call.1} parent=1 // loop_pre_header
      _
    $region3: #{tpu_custom_call.1} parent=1 // loop_header
      %s15 = sphi 0, %s19
      %p16 = scmp.ge.s32.totalorder %s15, 8
      %s22 = sphi 0, %s34
      %s23 = sphi 0, %s30
      %s24 = sphi 0, %s22
      %s25 = sphi 0, %s23
      %s26 = sphi 0, %s24
      %s27 = sphi 0, %s25
      %s39 = sphi 0, %s41
      %s42 = sphi 0, %s39
      %s43 = sphi 0, %s42
      %s59 = sphi 0, %s43
      %s67 = sphi 0, %s69
      %s70 = sphi 0, %s67
      %s71 = sphi 0, %s70
      %s87 = sphi 0, %s71
      %s95 = sphi 0, %s97
      %s98 = sphi 0, %s95
      %s99 = sphi 0, %s98
      %s115 = sphi 0, %s99
      %s121 = sphi 0, %s123
      %s124 = sphi 0, %s121
      %s125 = sphi 0, %s124
      %s141 = sphi 0, %s125
    $region4: #{tpu_custom_call.1} parent=1 // loop_header_branch
      %18 = sbr.rel (%p16) target = $region8
    $region5: #{tpu_custom_call.1} parent=1 // loop_body
      %s20 = ssub.s32 %s15, 1
      %s21 = ssub.s32 %s15, 2
      %s28 = sadd.s32 1, %s23
      %p29 = scmp.ge.s32.totalorder %s28, 3
      %s30 = scalar_select %p29, 0, %s28
      %s31 = sadd.s32 1, %s22
      %s32 = scalar_select %p29, %s31, %s22
      %p33 = scmp.ge.s32.totalorder %s32, 2
      %s34 = scalar_select %p33, 0, %s32
      %s35 = ssub.s32 %s22, %s34
      %s36 = ssub.s32 %s23, %s30
      %s37 = sor.u32 %s35, %s36
      %p38 = scmp.eq.s32.totalorder %s37, 0
      %s40 = sadd.s32 %s39, 1
      %s41 = scalar_select %p38, %s39, %s40
      %p44 = pneg %p38
      %p45 = scmp.eq.s32.totalorder %s15, 5
      %p46 = por %p44, %p45
      %p47 = scmp.ne.s32.totalorder %s39, %s42
      %p48 = scmp.eq.s32.totalorder %s15, 0
      %p49 = por %p47, %p48
      %p50 = scmp.ne.s32.totalorder %s39, %s42
      %p51 = scmp.eq.s32.totalorder %s20, 5
      %p52 = por %p50, %p51
      %p53 = scmp.ne.s32.totalorder %s42, %s43
      %p54 = scmp.eq.s32.totalorder %s20, 0
      %p55 = por %p53, %p54
      %p56 = scmp.ne.s32.totalorder %s42, %s43
      %p57 = scmp.eq.s32.totalorder %s21, 5
      %p58 = por %p56, %p57
      %p60 = scmp.ne.s32.totalorder %s43, %s59
      %p61 = scmp.eq.s32.totalorder %s21, 0
      %p62 = por %p60, %p61
      %s63 = ssub.s32 %s22, %s34
      %s64 = ssub.s32 %s23, %s30
      %s65 = sor.u32 %s63, %s64
      %p66 = scmp.eq.s32.totalorder %s65, 0
      %s68 = sadd.s32 %s67, 1
      %s69 = scalar_select %p66, %s67, %s68
      %p72 = pneg %p66
      %p73 = scmp.eq.s32.totalorder %s15, 5
      %p74 = por %p72, %p73
      %p75 = scmp.ne.s32.totalorder %s67, %s70
      %p76 = scmp.eq.s32.totalorder %s15, 0
      %p77 = por %p75, %p76
      %p78 = scmp.ne.s32.totalorder %s67, %s70
      %p79 = scmp.eq.s32.totalorder %s20, 5
      %p80 = por %p78, %p79
      %p81 = scmp.ne.s32.totalorder %s70, %s71
      %p82 = scmp.eq.s32.totalorder %s20, 0
      %p83 = por %p81, %p82
      %p84 = scmp.ne.s32.totalorder %s70, %s71
      %p85 = scmp.eq.s32.totalorder %s21, 5
      %p86 = por %p84, %p85
      %p88 = scmp.ne.s32.totalorder %s71, %s87
      %p89 = scmp.eq.s32.totalorder %s21, 0
      %p90 = por %p88, %p89
      %s91 = ssub.s32 %s22, %s34
      %s92 = ssub.s32 %s23, %s30
      %s93 = sor.u32 %s91, %s92
      %p94 = scmp.eq.s32.totalorder %s93, 0
      %s96 = sadd.s32 %s95, 1
      %s97 = scalar_select %p94, %s95, %s96
      %p100 = pneg %p94
      %p101 = scmp.eq.s32.totalorder %s15, 5
      %p102 = por %p100, %p101
      %p103 = scmp.ne.s32.totalorder %s95, %s98
      %p104 = scmp.eq.s32.totalorder %s15, 0
      %p105 = por %p103, %p104
      %p106 = scmp.ne.s32.totalorder %s95, %s98
      %p107 = scmp.eq.s32.totalorder %s20, 5
      %p108 = por %p106, %p107
      %p109 = scmp.ne.s32.totalorder %s98, %s99
      %p110 = scmp.eq.s32.totalorder %s20, 0
      %p111 = por %p109, %p110
      %p112 = scmp.ne.s32.totalorder %s98, %s99
      %p113 = scmp.eq.s32.totalorder %s21, 5
      %p114 = por %p112, %p113
      %p116 = scmp.ne.s32.totalorder %s99, %s115
      %p117 = scmp.eq.s32.totalorder %s21, 0
      %p118 = por %p116, %p117
      %s119 = ssub.s32 %s22, %s34
      %p120 = scmp.eq.s32.totalorder %s119, 0
      %s122 = sadd.s32 %s121, 1
      %s123 = scalar_select %p120, %s121, %s122
      %p126 = pneg %p120
      %p127 = scmp.eq.s32.totalorder %s15, 5
      %p128 = por %p126, %p127
      %p129 = scmp.ne.s32.totalorder %s121, %s124
      %p130 = scmp.eq.s32.totalorder %s15, 0
      %p131 = por %p129, %p130
      %p132 = scmp.ne.s32.totalorder %s121, %s124
      %p133 = scmp.eq.s32.totalorder %s20, 5
      %p134 = por %p132, %p133
      %p135 = scmp.ne.s32.totalorder %s124, %s125
      %p136 = scmp.eq.s32.totalorder %s20, 0
      %p137 = por %p135, %p136
      %p138 = scmp.ne.s32.totalorder %s124, %s125
      %p139 = scmp.eq.s32.totalorder %s21, 5
      %p140 = por %p138, %p139
      %p142 = scmp.ne.s32.totalorder %s125, %s141
      %p143 = scmp.eq.s32.totalorder %s21, 0
      %p144 = por %p142, %p143
      %p145 = scmp.le.s32.totalorder 1, %s15
      %p146 = scmp.lt.s32.totalorder %s15, 7
      %p147 = pnand %p145, %p146
      %p148 = pneg %p147
      // Predicated region
      $region9: #{tpu_custom_call.1} parent=5 // pred_check
        _
      $region10: #{tpu_custom_call.1} parent=5 // pred_check_branch
        %150 = sbr.rel (%p147) target = $region12
      $region11: #{tpu_custom_call.1} parent=5 // pred_region
        %s151 = ssub.s32 %s15, 1
      $region12: #{tpu_custom_call.1} parent=5 // pred_fallthru
        _
      %p152 = scmp.lt.s32.totalorder %s15, 6
      // Predicated region
      $region13: #{tpu_custom_call.1} parent=5 // pred_check
        %p153 = pneg %p152
      $region14: #{tpu_custom_call.1} parent=5 // pred_check_branch
        %155 = sbr.rel (%p153) target = $region16
      $region15: #{tpu_custom_call.1} parent=5 // pred_region
        // Predicated region
        $region17: #{tpu_custom_call.1} parent=15 // pred_check
          %p156 = pneg %p49
        $region18: #{tpu_custom_call.1} parent=15 // pred_check_branch
          %158 = sbr.rel (%p156) target = $region20
        $region19: #{tpu_custom_call.1} parent=15 // pred_region
          %s159 = sand.u32 %s39, 1
          %s160 = scalar_lea.sflag [#allocation5], %s159
          %s161 = sand.u32 %s39, 1
          %s162 = smul.addr %s161, 16
          %s163 = scalar_lea.vmem [#allocation4], %s162
          %s164 = smul.u32 2, %s22
          %s166 = ssub.s32 256, 256
          %167 = vsyncadd %s160, %s166
          %s168 = smul.addr %s164, 3
          %s169 = sadd.s32 %s23, %s168
          %s170 = smul.addr %s169, 128
          %s171 = scalar_lea.hbm %s0, %s170
          %s172 = sshll.u32 %s163, 4
          %s173 = int_to_ptr.vmem [resolvable:$true] %s172
          %178 = dma.hbm_to_vmem [thread:$0]  %s171, 256, %s173, %s160, 384, 128, 8
        $region20: #{tpu_custom_call.1} parent=15 // pred_fallthru
          _
        // Predicated region
        $region21: #{tpu_custom_call.1} parent=15 // pred_check
          %p179 = pneg %p77
        $region22: #{tpu_custom_call.1} parent=15 // pred_check_branch
          %181 = sbr.rel (%p179) target = $region24
        $region23: #{tpu_custom_call.1} parent=15 // pred_region
          %s182 = sand.u32 %s15, 1
          %s183 = scalar_lea.sflag [#allocation7], %s182
          %s184 = sand.u32 %s67, 1
          %s185 = smul.addr %s184, 8
          %s186 = scalar_lea.vmem [#allocation6], %s185
          %s187 = smul.u32 2, %s22
          %s189 = ssub.s32 128, 128
          %190 = vsyncadd %s183, %s189
          %s191 = smul.addr %s187, 3
          %s192 = sadd.s32 %s23, %s191
          %s193 = smul.addr %s192, 64
          %s194 = scalar_lea.hbm %s1, %s193
          %s195 = sshll.u32 %s186, 4
          %s196 = int_to_ptr.vmem [resolvable:$true] %s195
          %201 = dma.hbm_to_vmem [thread:$0]  %s194, 128, %s196, %s183, 192, 64, 4
        $region24: #{tpu_custom_call.1} parent=15 // pred_fallthru
          _
        // Predicated region
        $region25: #{tpu_custom_call.1} parent=15 // pred_check
          %p202 = pneg %p105
        $region26: #{tpu_custom_call.1} parent=15 // pred_check_branch
          %204 = sbr.rel (%p202) target = $region28
        $region27: #{tpu_custom_call.1} parent=15 // pred_region
          %s205 = sand.u32 %s15, 1
          %s206 = scalar_lea.sflag [#allocation7], %s205
          %s207 = sand.u32 %s95, 1
          %s208 = smul.addr %s207, 8
          %s209 = scalar_lea.vmem [#allocation8], %s208
          %s210 = smul.u32 2, %s22
          %s212 = ssub.s32 128, 128
          %213 = vsyncadd %s206, %s212
          %s214 = smul.addr %s210, 3
          %s215 = sadd.s32 %s23, %s214
          %s216 = smul.addr %s215, 64
          %s217 = scalar_lea.hbm %s2, %s216
          %s218 = sshll.u32 %s209, 4
          %s219 = int_to_ptr.vmem [resolvable:$true] %s218
          %224 = dma.hbm_to_vmem [thread:$0]  %s217, 128, %s219, %s206, 192, 64, 4
        $region28: #{tpu_custom_call.1} parent=15 // pred_fallthru
          _
      $region16: #{tpu_custom_call.1} parent=5 // pred_fallthru
        _
      %p225 = scmp.le.s32.totalorder 1, %s15
      %p226 = scmp.lt.s32.totalorder %s15, 7
      %p227 = pnand %p225, %p226
      %p228 = pneg %p227
      // Predicated region
      $region29: #{tpu_custom_call.1} parent=5 // pred_check
        _
      $region30: #{tpu_custom_call.1} parent=5 // pred_check_branch
        %230 = sbr.rel (%p227) target = $region32
      $region31: #{tpu_custom_call.1} parent=5 // pred_region
        %s231 = ssub.s32 %s15, 1
        %s232 = sand.u32 %s42, 1
        %s233 = scalar_lea.sflag [#allocation5], %s232
        %s234 = sand.u32 %s42, 1
        %s235 = smul.addr %s234, 16
        %s236 = scalar_lea.vmem [#allocation4], %s235
        // Predicated region
        $region33: #{tpu_custom_call.1} parent=31 // pred_check
          %p237 = pneg %p55
        $region34: #{tpu_custom_call.1} parent=31 // pred_check_branch
          %239 = sbr.rel (%p237) target = $region36
        $region35: #{tpu_custom_call.1} parent=31 // pred_region
          %240 = dma.done %s233, 256
        $region36: #{tpu_custom_call.1} parent=31 // pred_fallthru
          _
        %s241 = sand.u32 %s20, 1
        %s242 = scalar_lea.sflag [#allocation7], %s241
        %s243 = sand.u32 %s70, 1
        %s244 = smul.addr %s243, 8
        %s245 = scalar_lea.vmem [#allocation6], %s244
        // Predicated region
        $region37: #{tpu_custom_call.1} parent=31 // pred_check
          %p246 = pneg %p83
        $region38: #{tpu_custom_call.1} parent=31 // pred_check_branch
          %248 = sbr.rel (%p246) target = $region40
        $region39: #{tpu_custom_call.1} parent=31 // pred_region
          %249 = dma.done %s242, 128
        $region40: #{tpu_custom_call.1} parent=31 // pred_fallthru
          _
        %s250 = sand.u32 %s20, 1
        %s251 = scalar_lea.sflag [#allocation7], %s250
        %s252 = sand.u32 %s98, 1
        %s253 = smul.addr %s252, 8
        %s254 = scalar_lea.vmem [#allocation8], %s253
        // Predicated region
        $region41: #{tpu_custom_call.1} parent=31 // pred_check
          %p255 = pneg %p111
        $region42: #{tpu_custom_call.1} parent=31 // pred_check_branch
          %257 = sbr.rel (%p255) target = $region44
        $region43: #{tpu_custom_call.1} parent=31 // pred_region
          %258 = dma.done %s251, 128
        $region44: #{tpu_custom_call.1} parent=31 // pred_fallthru
          _
        %s259 = sand.u32 %s42, 1
        %s260 = scalar_lea.sflag [#allocation5], %s259
        %s261 = sand.u32 %s42, 1
        %s262 = smul.addr %s261, 16
        %s263 = scalar_lea.vmem [#allocation4], %s262
        %p264 = pneg %p55
        %p265 = pneg %p52
        %s266 = sand.u32 %s20, 1
        %s267 = scalar_lea.sflag [#allocation7], %s266
        %s268 = sand.u32 %s70, 1
        %s269 = smul.addr %s268, 8
        %s270 = scalar_lea.vmem [#allocation6], %s269
        %p271 = pneg %p83
        %p272 = pneg %p80
        %s273 = sand.u32 %s20, 1
        %s274 = scalar_lea.sflag [#allocation7], %s273
        %s275 = sand.u32 %s98, 1
        %s276 = smul.addr %s275, 8
        %s277 = scalar_lea.vmem [#allocation8], %s276
        %p278 = pneg %p111
        %p279 = pneg %p108
        %p280 = pneg %p137
        %p281 = pneg %p134
        %s282 = smul.u32 2, %s24
        %p283 = scmp.lt.s32.totalorder %s282, 3
        %s284 = scalar_select %p283, %s282, 3
        %s285 = smul.addr %s284, 8
        %s286 = scalar_lea.vmem %s3, %s285
        %s287 = smul.u32 2, %s24
        %s288 = smul.u32 2, %s24
        %s289 = smul.u32 2, %s24
        %s290 = smul.u32 2, %s24
        %p291 = scmp.lt.s32.totalorder %s290, 3
        %s292 = scalar_select %p291, %s290, 3
        %s293 = smul.addr %s292, 8
        %s294 = scalar_lea.vmem %s3, %s293
        %s295 = smul.u32 2, %s24
        %p296 = scmp.eq.s32.totalorder %s25, 0
        // Predicated region
        $region45: #{tpu_custom_call.1} parent=31 // pred_check
          %p297 = pneg %p296
        $region46: #{tpu_custom_call.1} parent=31 // pred_check_branch
          %299 = sbr.rel (%p297) target = $region48
        $region47: #{tpu_custom_call.1} parent=31 // pred_region
          %vm300 = vcmask 7168
          %301 = vst.msk [vmem:[#allocation2] sm:$0xff] %vm300, 0.0
          %302 = vst.msk [vmem:[#allocation2 + $0x8] sm:$0xff] %vm300, 0.0
          %303 = vst.msk [vmem:[#allocation3] sm:$0xff] %vm300, 0.0
          %304 = vst.msk [vmem:[#allocation3 + $0x8] sm:$0xff] %vm300, 0.0
        $region48: #{tpu_custom_call.1} parent=31 // pred_fallthru
          _
        %v305 = vld [vmem:[%s236] sm:$0xff]
        %v306 = vld [vmem:[%s236 + $0x8] sm:$0xff]
        %v307 = vld [vmem:[%s245] sm:$0xf]
        %v308 = vld [vmem:[%s245 + $0x4] sm:$0xf]
        %v309 = vunpack.c.l.bf16 %v307
        %v310 = vunpack.c.l.bf16 %v308
        %v311 = vld [vmem:[%s254] sm:$0xf]
        %v312 = vld [vmem:[%s254 + $0x4] sm:$0xf]
        %v313 = vunpack.c.l.bf16 %v311
        %v314 = vunpack.c.l.bf16 %v312
        %v315 = vmax.f32 %v305, 0.0
        %v316 = vmax.f32 %v306, 0.0
        %v317 = vmul.f32 %v305, %v309
        %v318 = vmul.f32 %v306, %v310
        %v319 = vsub.f32 %v315, %v317
        %v320 = vsub.f32 %v316, %v318
        %v321 = vand.u32 2147483647, %v305
        %v322 = vand.u32 2147483647, %v306
        %v323 = vsub.f32 0.0, %v321
        %v324 = vsub.f32 0.0, %v322
        %v325 = vmul.f32 %v323, 1.442695
        %v326 = vpow.pop %v325
        %v327 = vmul.f32 %v324, 1.442695
        %v328 = vpow.pop %v327
        %v329 = vadd.f32 %v326, 1.0
        %v330 = vlog2.pop %v329
        %v331 = vmul.f32 %v330, 0.6931472
        %v332 = vmul.f32 -0.5, %v326
        %v333 = vadd.f32 %v332, 1.0
        %v334 = vmul.f32 %v333, %v326
        %v335 = vand.u32 2147483647, %v326
        %vm336 = vcmp.lt.f32.partialorder %v335, 0.0004427343
        %v337 = vsel %vm336, %v334, %v331
        %v338 = vadd.f32 %v328, 1.0
        %v339 = vlog2.pop %v338
        %v340 = vmul.f32 %v339, 0.6931472
        %v341 = vmul.f32 -0.5, %v328
        %v342 = vadd.f32 %v341, 1.0
        %v343 = vmul.f32 %v342, %v328
        %v344 = vand.u32 2147483647, %v328
        %vm345 = vcmp.lt.f32.partialorder %v344, 0.0004427343
        %v346 = vsel %vm345, %v343, %v340
        %v347 = vadd.f32 %v319, %v337
        %v348 = vadd.f32 %v320, %v346
        %v349 = vmul.f32 %v347, %v313
        %v350 = vmul.f32 %v348, %v314
        %v351 = vlaneseq
        %v352 = vand.u32 %v351, 127
        %s353 = smul.u32 %s25, 128
        %v354 = vstv %s353
        %v355 = vadd.s32 %v352, %v354
        %vm356 = vcmp.lt.s32.totalorder %v355, 300
        %v357 = vsel %vm356, %v349, 0.0
        %v358 = vsel %vm356, %v350, 0.0
        %v359 = vsel %vm356, %v313, 0.0
        %v360 = vsel %vm356, %v314, 0.0
        %v361 = vld [vmem:[#allocation2] sm:$0xff]
        %v362 = vld [vmem:[#allocation2 + $0x8] sm:$0xff]
        %363 = vadd.xlane.f32.xlu0 %v357
        %v364 = vpop.xlane.xlu0 %363
        %365 = vadd.xlane.f32.xlu0 %v358
        %v366 = vpop.xlane.xlu0 %365
        %v367 = vadd.f32 %v361, %v364
        %v368 = vadd.f32 %v362, %v366
        %vm369 = vcmask 7168
        %370 = vst.msk [vmem:[#allocation2] sm:$0xff] %vm369, %v367
        %371 = vst.msk [vmem:[#allocation2 + $0x8] sm:$0xff] %vm369, %v368
        %v372 = vld [vmem:[#allocation3] sm:$0xff]
        %v373 = vld [vmem:[#allocation3 + $0x8] sm:$0xff]
        %374 = vadd.xlane.f32.xlu0 %v359
        %v375 = vpop.xlane.xlu0 %374
        %376 = vadd.xlane.f32.xlu0 %v360
        %v377 = vpop.xlane.xlu0 %376
        %v378 = vadd.f32 %v372, %v375
        %v379 = vadd.f32 %v373, %v377
        %380 = vst.msk [vmem:[#allocation3] sm:$0xff] %vm369, %v378
        %381 = vst.msk [vmem:[#allocation3 + $0x8] sm:$0xff] %vm369, %v379
        %p382 = scmp.eq.s32.totalorder %s25, 2
        // Predicated region
        $region49: #{tpu_custom_call.1} parent=31 // pred_check
          %p383 = pneg %p382
        $region50: #{tpu_custom_call.1} parent=31 // pred_check_branch
          %385 = sbr.rel (%p383) target = $region52
        $region51: #{tpu_custom_call.1} parent=31 // pred_region
          %v386 = vld [vmem:[#allocation2] sm:$0xff]
          %v387 = vld [vmem:[#allocation2 + $0x8] sm:$0xff]
          %v388 = vld [vmem:[#allocation3] sm:$0xff]
          %v389 = vld [vmem:[#allocation3 + $0x8] sm:$0xff]
          %v390 = vrcp.pop %v388
          %v391 = vmul.f32 %v386, %v390
          %v392 = vrcp.pop %v389
          %v393 = vmul.f32 %v387, %v392
          %394 = vst.msk [vmem:[%s294] sm:$0xff] %vm369, %v391
          %395 = vst.msk [vmem:[%s294 + $0x8] sm:$0xff] %vm369, %v393
        $region52: #{tpu_custom_call.1} parent=31 // pred_fallthru
          _
        %s396 = smul.u32 2, %s24
        %p397 = scmp.lt.s32.totalorder %s396, 3
        %s398 = scalar_select %p397, %s396, 3
        %s399 = smul.addr %s398, 8
        %s400 = scalar_lea.vmem %s3, %s399
        // Predicated region
        $region53: #{tpu_custom_call.1} parent=31 // pred_check
          %p401 = pneg %p134
        $region54: #{tpu_custom_call.1} parent=31 // pred_check_branch
          %403 = sbr.rel (%p401) target = $region56
        $region55: #{tpu_custom_call.1} parent=31 // pred_region
          %s404 = smul.u32 2, %s24
        $region56: #{tpu_custom_call.1} parent=31 // pred_fallthru
          _
      $region32: #{tpu_custom_call.1} parent=5 // pred_fallthru
        _
      %p405 = scmp.le.s32.totalorder 2, %s15
      // Predicated region
      $region57: #{tpu_custom_call.1} parent=5 // pred_check
        %p406 = pneg %p405
      $region58: #{tpu_custom_call.1} parent=5 // pred_check_branch
        %408 = sbr.rel (%p406) target = $region60
      $region59: #{tpu_custom_call.1} parent=5 // pred_region
        %s409 = ssub.s32 %s15, 2
        // Predicated region
        $region61: #{tpu_custom_call.1} parent=59 // pred_check
          %p410 = pneg %p140
        $region62: #{tpu_custom_call.1} parent=59 // pred_check_branch
          %412 = sbr.rel (%p410) target = $region64
        $region63: #{tpu_custom_call.1} parent=59 // pred_region
          %s413 = smul.u32 2, %s26
          %p414 = scmp.lt.s32.totalorder %s413, 3
          %s415 = scalar_select %p414, %s413, 3
          %s416 = smul.addr %s415, 8
          %s417 = scalar_lea.vmem %s3, %s416
        $region64: #{tpu_custom_call.1} parent=59 // pred_fallthru
          _
      $region60: #{tpu_custom_call.1} parent=5 // pred_fallthru
        _
    $region6: #{tpu_custom_call.1} parent=1 // loop_footer
      %s19 = sadd.s32 1, %s15
    $region7: #{tpu_custom_call.1} parent=1 // loop_footer_branch
      %14 = sbr.rel target = $region3
    $region8: #{tpu_custom_call.1} parent=1 // loop_exit
      _
    %418 = vsyncpa [#allocation5], 1
    %s419 = scalar_lea.sflag [#allocation5], 1
    %420 = vsyncpa %s419, 1
    %421 = vsyncpa [#allocation7], 1
    %s422 = scalar_lea.sflag [#allocation7], 1
    %423 = vsyncpa %s422, 1

</llo_original>
